<compile_context>
chip_gen: v6e
topology: v6e:2x2x1
jax: 0.10.0
libtpu: 0.0.40
codegen_flags: <defaults>
</compile_context>

<pallas_src>
import functools

import jax
import jax.numpy as jnp
from jax.experimental import pallas as pl
from jax.experimental.pallas import tpu as pltpu

P_SQ = 1.0 ** 2  # matches ReQLU.__init__ (self.p_sq = 1 ** 2)
_LANES = 128


def _reqlu_kernel(x_ref, o_ref):
    # relu + p_sq*(sqrt(1 + r^2/p_sq) - 1), written in the cancellation-free
    # form r^2 / (1 + sqrt(1 + r^2/p_sq)).  VPU + one EUP sqrt per element;
    # compute in f32 internally (free: kernel is DMA-bound).
    x = x_ref[...].astype(jnp.float32)
    r = jnp.maximum(x, 0.0)
    r2 = r * r
    y = r2 / (1.0 + jnp.sqrt(1.0 + r2 * (1.0 / P_SQ)))
    o_ref[...] = y.astype(o_ref.dtype)


@functools.lru_cache(maxsize=1)
def _tpu_defaults():
    """Returns (tile_bytes, vmem_limit_bytes_or_None, use_core_parallel)."""
    kind = ""
    try:
        kind = jax.devices()[0].device_kind.lower()
    except Exception:
        pass
    vmem_cap = None
    try:
        vmem_cap = getattr(pltpu.get_tpu_info(), "vmem_capacity_bytes", None)
        vmem_cap = int(vmem_cap) if vmem_cap is not None else None
    except Exception:
        vmem_cap = None

    if "v5 lite" in kind or "v5e" in kind:
        # ~0.82 TB/s HBM: 2 MiB tiles already sit at roofline; double-buffered
        # in+out footprint (8 MiB) stays inside the 16 MiB scoped VMEM default.
        return (2 << 20), None, False
    if vmem_cap is not None and vmem_cap <= (64 << 20):
        # v7x-like (64 MiB VMEM, 2 TCs, ~3.2 TB/s): 4 MiB tiles amortize the
        # ~0.35 us per-grid-step overhead; raise the scoped limit and shard the
        # sequential grid loop across both TensorCores.
        return (4 << 20), (40 << 20), True
    if vmem_cap is not None and vmem_cap >= (100 << 20):
        # v6e/v4-class (128 MiB VMEM, 32 MiB scoped default): 4 MiB tiles need
        # ~16 MiB of buffering, no flag change required.
        return (4 << 20), None, False
    # Unknown chip: conservative 1 MiB tiles, default scoped VMEM.
    return (1 << 20), None, False


@functools.partial(
    jax.jit,
    static_argnames=("block_rows", "donate", "vmem_limit_bytes", "core_parallel"),
)
def _reqlu_jit(x, *, block_rows, donate, vmem_limit_bytes, core_parallel):
    orig_shape = x.shape
    dtype = x.dtype
    n = x.size
    itemsize = jnp.dtype(dtype).itemsize

    # Present a lane-dense (rows, 128) slab; lane axis = fast vreg axis.
    rows = pl.cdiv(n, _LANES)
    n_slab = rows * _LANES

    x_flat = x.reshape(-1)
    padded = n_slab != n
    if padded:
        # Zero pad is semantically safe: relu(0)=0 -> ReQLU(0)=0.
        # TODO(synk): replace pad + tail-slice with an in-kernel masked store
        # (scalar-prefetched valid length) to save the extra HBM passes on
        # large ragged (n % 128 != 0) tensors.
        x_flat = jnp.pad(x_flat, (0, n_slab - n))
    x2d = x_flat.reshape(rows, _LANES)

    # Tile rows.  Keep at least 2 grid steps for big-enough slabs so the
    # pipeline overlaps read(i+1)/write(i) (and both TCs get work on v7x).
    if rows > block_rows:
        br = block_rows
    elif rows >= 1024:  # >= 0.5 MiB f32
        br = (((rows + 1) // 2) + 7) // 8 * 8
    else:
        br = rows  # block dim == full array dim is always a legal layout
    grid = (pl.cdiv(rows, br),)

    dim_sem = (pltpu.CORE_PARALLEL,) if core_parallel else ("parallel",)
    cp_kwargs = dict(dimension_semantics=dim_sem)
    if vmem_limit_bytes is not None:
        cp_kwargs["vmem_limit_bytes"] = vmem_limit_bytes

    out2d = pl.pallas_call(
        _reqlu_kernel,
        out_shape=jax.ShapeDtypeStruct((rows, _LANES), dtype),
        grid_spec=pltpu.PrefetchScalarGridSpec(
            num_scalar_prefetch=0,
            grid=grid,
            in_specs=[pl.BlockSpec((br, _LANES), lambda i: (i, 0))],
            out_specs=pl.BlockSpec((br, _LANES), lambda i: (i, 0)),
        ),
        compiler_params=pltpu.CompilerParams(**cp_kwargs),
        input_output_aliases=({0: 0} if donate else {}),
        cost_estimate=pl.CostEstimate(
            flops=7 * n_slab,
            transcendentals=n_slab,
            bytes_accessed=2 * n_slab * itemsize,
        ),
    )(x2d)

    if padded:
        return out2d.reshape(-1)[:n].reshape(orig_shape)
    return out2d.reshape(orig_shape)


def reqlu(x: jax.Array, *, donate: bool = False) -> jax.Array:
    """Elementwise ReQLU via a Pallas TPU kernel. Works for any shape.

    donate=True additionally aliases the kernel's input/output HBM buffer;
    only use it when `x` is genuinely dead after the call (e.g. also donated
    at the enclosing jit boundary), otherwise it is a pessimization.
    """
    if x.size == 0:
        return x
    tile_bytes, vmem_limit_bytes, core_parallel = _tpu_defaults()
    itemsize = jnp.dtype(x.dtype).itemsize
    block_rows = max(8, (tile_bytes // (_LANES * itemsize)) // 8 * 8)
    return _reqlu_jit(
        x,
        block_rows=block_rows,
        donate=donate,
        vmem_limit_bytes=vmem_limit_bytes,
        core_parallel=core_parallel,
    )


def reqlu_ref(x: jax.Array) -> jax.Array:
    # Literal PyTorch formula (for validation).
    xf = x.astype(jnp.float32)
    r = jnp.maximum(xf, 0.0)
    y = P_SQ * (jnp.sqrt(1.0 + r * r / P_SQ) - 1.0)
    return y.astype(x.dtype)


if __name__ == "__main__":
    key = jax.random.PRNGKey(0)
    k1, k2, k3 = jax.random.split(key, 3)

    # NCHW-like conv-feature input, consistent with where this activation is used.
    x = jax.random.normal(k1, (2, 4, 16, 16), dtype=jnp.float32)
    y = jax.block_until_ready(reqlu(x))
    y_ref = reqlu_ref(x)
    assert y.shape == x.shape and y.dtype == x.dtype
    assert jnp.allclose(y, y_ref, atol=1e-6, rtol=1e-6), "mismatch vs reference"

    # Ragged shape (n % 128 != 0) exercises the padded-edge path.
    x2 = jax.random.normal(k2, (3, 50, 7), dtype=jnp.float32)
    y2 = jax.block_until_ready(reqlu(x2))
    y2_ref = reqlu_ref(x2)
    assert y2.shape == x2.shape and y2.dtype == x2.dtype
    assert jnp.allclose(y2, y2_ref, atol=1e-6, rtol=1e-6), "mismatch vs reference (ragged)"

    # Bigger aligned shape exercises the multi-step grid / pipelined path.
    x3 = jax.random.normal(k3, (4, 8, 128, 128), dtype=jnp.float32)
    y3 = jax.block_until_ready(reqlu(x3))
    y3_ref = reqlu_ref(x3)
    assert y3.shape == x3.shape and y3.dtype == x3.dtype
    assert jnp.allclose(y3, y3_ref, atol=1e-6, rtol=1e-6), "mismatch vs reference (tiled)"

    print("KERNEL_OK")
</pallas_src>

<mosaic_0001>
module attributes {stable_mosaic.version = 11 : i64} {
  func.func @_reqlu_kernel(%arg0: i32, %arg1: memref<16x128xf32, #tpu.memory_space<vmem>>, %arg2: memref<16x128xf32, #tpu.memory_space<vmem>>) attributes {dimension_semantics = [#tpu.dimension_semantics<parallel>], iteration_bounds = array<i64: 1>, scalar_prefetch = 0 : i64, scratch_operands = 0 : i64, tpu.core_type = #tpu.core_type<tc>, window_params = [{transform_indices = @transform_0, window_bounds = array<i64: 16, 128>}, {transform_indices = @transform_1, window_bounds = array<i64: 16, 128>}]} {
    %c0 = arith.constant 0 : index
    %c0_0 = arith.constant 0 : index
    %0 = vector.load %arg1[%c0, %c0_0] : memref<16x128xf32, #tpu.memory_space<vmem>>, vector<16x128xf32>
    %cst = arith.constant 0.000000e+00 : f32
    %1 = vector.broadcast %cst : f32 to vector<16x128xf32>
    %2 = arith.maximumf %0, %1 : vector<16x128xf32>
    %3 = arith.mulf %2, %2 : vector<16x128xf32>
    %cst_1 = arith.constant 1.000000e+00 : f32
    %4 = vector.broadcast %cst_1 : f32 to vector<16x128xf32>
    %5 = arith.mulf %3, %4 : vector<16x128xf32>
    %cst_2 = arith.constant 1.000000e+00 : f32
    %6 = vector.broadcast %cst_2 : f32 to vector<16x128xf32>
    %7 = arith.addf %6, %5 : vector<16x128xf32>
    %8 = math.sqrt %7 : vector<16x128xf32>
    %cst_3 = arith.constant 1.000000e+00 : f32
    %9 = vector.broadcast %cst_3 : f32 to vector<16x128xf32>
    %10 = arith.addf %9, %8 : vector<16x128xf32>
    %11 = arith.divf %3, %10 : vector<16x128xf32>
    %c0_4 = arith.constant 0 : index
    %c0_5 = arith.constant 0 : index
    %12 = vector.load %arg2[%c0_4, %c0_5] : memref<16x128xf32, #tpu.memory_space<vmem>>, vector<16x128xf32>
    tpu.vector_store %arg2[%c0_4, %c0_5], %11 {strides = array<i32>} : memref<16x128xf32, #tpu.memory_space<vmem>>, vector<16x128xf32>,
    return
  }
  func.func @transform_0(%arg0: i32) -> (i32, i32) {
    %c0_i32 = arith.constant 0 : i32
    %c0_i32_0 = arith.constant 0 : i32
    return %arg0, %c0_i32 : i32, i32
  }
  func.func @transform_1(%arg0: i32) -> (i32, i32) {
    %c0_i32 = arith.constant 0 : i32
    %c0_i32_0 = arith.constant 0 : i32
    return %arg0, %c0_i32 : i32, i32
  }
}

</mosaic_0001>

<llo_original>
// kernel: _reqlu_jit.1
$region0: #{_reqlu_jit.1}
  #allocation0 [shape = 'u32[]', space=smem, size = 0x4, offset = 0x4, fixed_abs, tag = 'smem constant byte address 0x4 - core index']
  #allocation1 [shape = 'u32[144,128]{1,0:T(1,128)}', space=vmem, size = 0x12000, scoped, tag = 'internal scratch']
  %s0 = inlined_call_operand.vmem [shape: f32[16,128], index: 0, kind: input, shape index: {}]
  %s1 = inlined_call_operand.vmem [shape: f32[16,128], index: 1, kind: output, shape index: {}]
  %s2 = sld [smem:[#allocation0]]
  $region14: #{_reqlu_jit.1} parent=0
    _
  %s4 = ssub.s32 1, %s2
  %s5 = scalar_select 0, %s4, %s2
  // Predicated region
  $region2: #{_reqlu_jit.1} parent=0 // pred_check
    _
  $region3: #{_reqlu_jit.1} parent=0 // pred_check_branch
    %7 = sbr.rel (0) target = $region5
  $region4: #{_reqlu_jit.1} parent=0 // pred_region
    _
  $region5: #{_reqlu_jit.1} parent=0 // pred_fallthru
    _
  %v8 = vld [vmem:[%s0] sm:$0xff]
  %v9 = vld [vmem:[%s0 + $0x8] sm:$0xff]
  %v10 = vmax.f32 %v8, 0.0
  %v11 = vmax.f32 %v9, 0.0
  %v12 = vmul.f32 %v10, %v10
  %v13 = vmul.f32 %v11, %v11
  %v14 = vadd.f32 %v12, 1.0
  %v15 = vadd.f32 %v13, 1.0
  %v16 = vrsqrt.pop %v14
  %v17 = vmul.f32 %v14, %v16
  %vm18 = vcmp.eq.f32.partialorder %v14, inf
  %v19 = vsel %vm18, %v14, %v17
  %vm20 = vcmp.eq.f32.partialorder %v14, 0.0
  %v21 = vand.u32 %v14, 2147483648
  %v22 = vsel %vm20, %v21, %v19
  %v23 = vrsqrt.pop %v15
  %v24 = vmul.f32 %v15, %v23
  %vm25 = vcmp.eq.f32.partialorder %v15, inf
  %v26 = vsel %vm25, %v15, %v24
  %vm27 = vcmp.eq.f32.partialorder %v15, 0.0
  %v28 = vand.u32 %v15, 2147483648
  %v29 = vsel %vm27, %v28, %v26
  %v30 = vadd.f32 %v22, 1.0
  %v31 = vadd.f32 %v29, 1.0
  %v32 = vrcp.pop %v30
  %v33 = vmul.f32 %v12, %v32
  %v34 = vrcp.pop %v31
  %v35 = vmul.f32 %v13, %v34
  %36 = vst [vmem:[%s1] sm:$0xff] %v33
  %37 = vst [vmem:[%s1 + $0x8] sm:$0xff] %v35
  // Predicated region
  $region6: #{_reqlu_jit.1} parent=0 // pred_check
    _
  $region7: #{_reqlu_jit.1} parent=0 // pred_check_branch
    %39 = sbr.rel (0) target = $region9
  $region8: #{_reqlu_jit.1} parent=0 // pred_region
    _
  $region9: #{_reqlu_jit.1} parent=0 // pred_fallthru
    _
  // Predicated region
  $region10: #{_reqlu_jit.1} parent=0 // pred_check
    _
  $region11: #{_reqlu_jit.1} parent=0 // pred_check_branch
    %41 = sbr.rel (0) target = $region13
  $region12: #{_reqlu_jit.1} parent=0 // pred_region
    _
  $region13: #{_reqlu_jit.1} parent=0 // pred_fallthru
    _

</llo_original>
